<compile_context>
chip_gen: v7x
topology: tpu7x:2x2x1
jax: 0.10.0
libtpu: 0.0.40
codegen_flags: <defaults>
</compile_context>

<pallas_src>
import functools
import math

import jax
import jax.numpy as jnp
from jax.experimental import pallas as pl
from jax.experimental.pallas import tpu as pltpu


# ----------------------------- meta / config ---------------------------------
N_FIELDS = 5
N_CONFIDENCES = 1
N_VECTORS = 1
N_SCALES = 1
VECTOR_OFFSETS = (True,)
UPSAMPLE_STRIDE = 1            # upsample_op is None in this configuration
N_COMP = N_CONFIDENCES + N_VECTORS * 3 + N_SCALES
C_OUT = N_FIELDS * N_COMP * (UPSAMPLE_STRIDE ** 2)

B, C_IN, H, W = 2, 8, 16, 16
HW = H * W

# TODO(synk): PixelShuffle + border crop path (upsample_stride > 1) not exercised here.
# Dropout2d has p=0.0 -> identity; surgery.save_tensor is a debug hook -> skipped.


# ------------------------------ Pallas kernel ---------------------------------
def _head_kernel(x_ref, w_ref, b_ref, o_ref, *, width, height, n_conf, n_vec,
                 n_comp, group, vector_offsets):
    # x_ref: (C_in, B*HW)   w_ref: (C_pad, C_in)   b_ref: (C_pad, 1)
    # o_ref: (C_pad, B*HW); rows are component-major groups of `group` (=8) rows.
    y = jnp.dot(w_ref[...], x_ref[...],
                preferred_element_type=jnp.float32) + b_ref[...]

    n_lanes = y.shape[1]
    # lane l = b*HW + h*W + w  ->  (col, row) of the index field
    lane = jax.lax.broadcasted_iota(jnp.int32, (1, n_lanes), 1)
    if (width & (width - 1)) == 0 and (height & (height - 1)) == 0:
        # powers of two: pure bitwise decode, no integer div/mod on the VPU
        col = (lane & (width - 1)).astype(jnp.float32)
        row = ((lane >> int(math.log2(width))) & (height - 1)).astype(jnp.float32)
    else:
        hw = lane % (width * height)
        col = (hw % width).astype(jnp.float32)
        row = (hw // width).astype(jnp.float32)

    first_scale = n_conf + 3 * n_vec
    # Static Python loop over components; every slice is 8-sublane aligned.
    for c in range(n_comp):
        sl = slice(c * group, (c + 1) * group)
        if c < n_conf:
            o_ref[sl, :] = jax.nn.sigmoid(y[sl, :])
        elif c < n_conf + 2 * n_vec:
            vi, xy = divmod(c - n_conf, 2)
            if vector_offsets[vi]:
                o_ref[sl, :] = y[sl, :] + (col if xy == 0 else row)
            else:
                o_ref[sl, :] = y[sl, :]
        elif c < first_scale:
            o_ref[sl, :] = y[sl, :]                # log_b passthrough
        else:
            o_ref[sl, :] = jax.nn.softplus(y[sl, :])


def _permute_pad_params(weight, bias, n_fields, n_comp, group):
    """Reorder conv rows field-major -> component-major and pad each component
    group to `group` rows so activation slices are sublane-tile aligned."""
    c_out, c_in = weight.shape
    assert c_out == n_fields * n_comp
    w = weight.reshape(n_fields, n_comp, c_in).transpose(1, 0, 2)   # (comp, field, cin)
    b = bias.reshape(n_fields, n_comp).transpose(1, 0)              # (comp, field)
    pad_f = group - n_fields
    w = jnp.pad(w, ((0, 0), (0, pad_f), (0, 0))).reshape(n_comp * group, c_in)
    b = jnp.pad(b, ((0, 0), (0, pad_f))).reshape(n_comp * group, 1)
    return w, b


def composite_field3_forward(x, weight, bias):
    """x: (B, C_in, H, W) float32; weight: (C_out, C_in); bias: (C_out,)."""
    b, c_in, h, w = x.shape
    hw = h * w
    bhw = b * hw
    group = -(-N_FIELDS // 8) * 8          # round up to sublane multiple (= 8)
    c_pad = N_COMP * group                 # 40 rows

    # lane index = b*HW + h*W + w
    x_flat = jnp.transpose(x, (1, 0, 2, 3)).reshape(c_in, bhw)
    w_pad, b_pad = _permute_pad_params(weight, bias, N_FIELDS, N_COMP, group)

    kernel = functools.partial(
        _head_kernel, width=w, height=h, n_conf=N_CONFIDENCES, n_vec=N_VECTORS,
        n_comp=N_COMP, group=group, vector_offsets=VECTOR_OFFSETS)

    out_flat = pl.pallas_call(
        kernel,
        out_shape=jax.ShapeDtypeStruct((c_pad, bhw), jnp.float32),
        grid=(1,),
        in_specs=[
            pl.BlockSpec((c_in, bhw), lambda i: (0, 0)),
            pl.BlockSpec((c_pad, c_in), lambda i: (0, 0)),
            pl.BlockSpec((c_pad, 1), lambda i: (0, 0)),
        ],
        out_specs=pl.BlockSpec((c_pad, bhw), lambda i: (0, 0)),
        compiler_params=pltpu.CompilerParams(
            dimension_semantics=("arbitrary",)),
    )(x_flat, w_pad, b_pad)

    # Undo the component-major grouping / padding; match the PyTorch
    # .view(B, n_fields, n_comp, H, W) layout.
    out = out_flat.reshape(N_COMP, group, b, h, w)[:, :N_FIELDS]
    return jnp.transpose(out, (2, 1, 0, 3, 4))


# ------------------------------ pure-JAX reference ----------------------------
def composite_field3_reference(x, weight, bias):
    b, c_in, h, w = x.shape
    y = jnp.einsum('bchw,oc->bohw', x, weight) + bias[None, :, None, None]
    y = y.reshape(b, N_FIELDS, N_COMP, h, w)
    nc = N_CONFIDENCES
    conf = jax.nn.sigmoid(y[:, :, 0:nc])
    reg_x = y[:, :, nc:nc + 1] + jnp.arange(w, dtype=y.dtype)[None, None, None, None, :]
    reg_y = y[:, :, nc + 1:nc + 2] + jnp.arange(h, dtype=y.dtype)[None, None, None, :, None]
    logb = y[:, :, nc + 2 * N_VECTORS:nc + 3 * N_VECTORS]
    scales = jax.nn.softplus(y[:, :, nc + 3 * N_VECTORS:])
    return jnp.concatenate([conf, reg_x, reg_y, logb, scales], axis=2)


# ----------------------------------- main -------------------------------------
if __name__ == "__main__":
    key = jax.random.PRNGKey(0)
    kx, kw, kb = jax.random.split(key, 3)

    x = jax.random.normal(kx, (B, C_IN, H, W), dtype=jnp.float32)
    # Conv2d(C_IN, C_OUT, kernel_size=1): weight (C_OUT, C_IN, 1, 1) -> squeeze
    fan_in = C_IN  # kernel_size=1
    bound = 1.0 / math.sqrt(fan_in)
    weight = jax.random.uniform(kw, (C_OUT, C_IN), jnp.float32, -bound, bound)
    bias = jax.random.uniform(kb, (C_OUT,), jnp.float32, -bound, bound)

    out = composite_field3_forward(x, weight, bias)
    out = jax.block_until_ready(out)

    ref = composite_field3_reference(x, weight, bias)
    assert out.shape == (B, N_FIELDS, N_COMP, H, W), out.shape
    assert jnp.allclose(out, ref, atol=1e-4, rtol=1e-4), \
        float(jnp.max(jnp.abs(out - ref)))

    print("KERNEL_OK")
</pallas_src>

<mosaic_0001>
module attributes {stable_mosaic.version = 11 : i64} {
  func.func @_head_kernel(%arg0: i32, %arg1: memref<8x512xf32, #tpu.memory_space<vmem>>, %arg2: memref<40x8xf32, #tpu.memory_space<vmem>>, %arg3: memref<40x1xf32, #tpu.memory_space<vmem>>, %arg4: memref<40x512xf32, #tpu.memory_space<vmem>>) attributes {dimension_semantics = [#tpu.dimension_semantics<arbitrary>], iteration_bounds = array<i64: 1>, scalar_prefetch = 0 : i64, scratch_operands = 0 : i64, tpu.core_type = #tpu.core_type<tc>, window_params = [{pipeline_mode = #tpu.pipeline_mode<synchronous>, transform_indices = @transform_0, window_bounds = array<i64: 8, 512>}, {pipeline_mode = #tpu.pipeline_mode<synchronous>, transform_indices = @transform_1, window_bounds = array<i64: 40, 8>}, {pipeline_mode = #tpu.pipeline_mode<synchronous>, transform_indices = @transform_2, window_bounds = array<i64: 40, 1>}, {pipeline_mode = #tpu.pipeline_mode<synchronous>, transform_indices = @transform_3, window_bounds = array<i64: 40, 512>}]} {
    %c0 = arith.constant 0 : index
    %c0_0 = arith.constant 0 : index
    %0 = vector.load %arg2[%c0, %c0_0] : memref<40x8xf32, #tpu.memory_space<vmem>>, vector<40x8xf32>
    %c0_1 = arith.constant 0 : index
    %c0_2 = arith.constant 0 : index
    %1 = vector.load %arg1[%c0_1, %c0_2] : memref<8x512xf32, #tpu.memory_space<vmem>>, vector<8x512xf32>
    %cst = arith.constant dense<0.000000e+00> : vector<40x512xf32>
    %2 = tpu.matmul %0, %1, %cst {dimension_numbers = #tpu.dot_dimension_numbers<[1], [0], [0], [1], [0, 0, 1, 1], [], []>} : vector<40x8xf32>, vector<8x512xf32>, vector<40x512xf32> -> vector<40x512xf32>
    %c0_3 = arith.constant 0 : index
    %c0_4 = arith.constant 0 : index
    %3 = vector.load %arg3[%c0_3, %c0_4] : memref<40x1xf32, #tpu.memory_space<vmem>>, vector<40x1xf32>
    %4 = vector.broadcast %3 : vector<40x1xf32> to vector<40x512xf32>
    %5 = arith.addf %2, %4 : vector<40x512xf32>
    %6 = tpu.iota {dimensions = array<i32: 1>} : vector<1x512xi32>
    %c15_i32 = arith.constant 15 : i32
    %7 = vector.broadcast %c15_i32 : i32 to vector<1x512xi32>
    %8 = arith.andi %6, %7 : vector<1x512xi32>
    %9 = arith.sitofp %8 : vector<1x512xi32> to vector<1x512xf32>
    %c4_i32 = arith.constant 4 : i32
    %10 = vector.broadcast %c4_i32 : i32 to vector<1x512xi32>
    %11 = arith.shrsi %6, %10 : vector<1x512xi32>
    %c15_i32_5 = arith.constant 15 : i32
    %12 = vector.broadcast %c15_i32_5 : i32 to vector<1x512xi32>
    %13 = arith.andi %11, %12 : vector<1x512xi32>
    %14 = arith.sitofp %13 : vector<1x512xi32> to vector<1x512xf32>
    %15 = vector.extract_strided_slice %5 {offsets = [0, 0], sizes = [8, 512], strides = [1, 1]} : vector<40x512xf32> to vector<8x512xf32>
    %16 = arith.negf %15 : vector<8x512xf32>
    %17 = math.exp %16 : vector<8x512xf32>
    %cst_6 = arith.constant 1.000000e+00 : f32
    %18 = vector.broadcast %cst_6 : f32 to vector<8x512xf32>
    %19 = arith.addf %18, %17 : vector<8x512xf32>
    %20 = arith.divf %18, %19 : vector<8x512xf32>
    %c0_7 = arith.constant 0 : index
    %c0_8 = arith.constant 0 : index
    %21 = vector.load %arg4[%c0_7, %c0_8] : memref<40x512xf32, #tpu.memory_space<vmem>>, vector<8x512xf32>
    tpu.vector_store %arg4[%c0_7, %c0_8], %20 {strides = array<i32>} : memref<40x512xf32, #tpu.memory_space<vmem>>, vector<8x512xf32>,
    %22 = vector.extract_strided_slice %5 {offsets = [8, 0], sizes = [8, 512], strides = [1, 1]} : vector<40x512xf32> to vector<8x512xf32>
    %23 = vector.broadcast %9 : vector<1x512xf32> to vector<8x512xf32>
    %24 = arith.addf %22, %23 : vector<8x512xf32>
    %c8 = arith.constant 8 : index
    %c0_9 = arith.constant 0 : index
    %25 = vector.load %arg4[%c8, %c0_9] : memref<40x512xf32, #tpu.memory_space<vmem>>, vector<8x512xf32>
    tpu.vector_store %arg4[%c8, %c0_9], %24 {strides = array<i32>} : memref<40x512xf32, #tpu.memory_space<vmem>>, vector<8x512xf32>,
    %26 = vector.extract_strided_slice %5 {offsets = [16, 0], sizes = [8, 512], strides = [1, 1]} : vector<40x512xf32> to vector<8x512xf32>
    %27 = vector.broadcast %14 : vector<1x512xf32> to vector<8x512xf32>
    %28 = arith.addf %26, %27 : vector<8x512xf32>
    %c16 = arith.constant 16 : index
    %c0_10 = arith.constant 0 : index
    %29 = vector.load %arg4[%c16, %c0_10] : memref<40x512xf32, #tpu.memory_space<vmem>>, vector<8x512xf32>
    tpu.vector_store %arg4[%c16, %c0_10], %28 {strides = array<i32>} : memref<40x512xf32, #tpu.memory_space<vmem>>, vector<8x512xf32>,
    %30 = vector.extract_strided_slice %5 {offsets = [24, 0], sizes = [8, 512], strides = [1, 1]} : vector<40x512xf32> to vector<8x512xf32>
    %c24 = arith.constant 24 : index
    %c0_11 = arith.constant 0 : index
    %31 = vector.load %arg4[%c24, %c0_11] : memref<40x512xf32, #tpu.memory_space<vmem>>, vector<8x512xf32>
    tpu.vector_store %arg4[%c24, %c0_11], %30 {strides = array<i32>} : memref<40x512xf32, #tpu.memory_space<vmem>>, vector<8x512xf32>,
    %32 = vector.extract_strided_slice %5 {offsets = [32, 0], sizes = [8, 512], strides = [1, 1]} : vector<40x512xf32> to vector<8x512xf32>
    %cst_12 = arith.constant 0.000000e+00 : f32
    %33 = vector.broadcast %cst_12 : f32 to vector<8x512xf32>
    %34 = arith.maximumf %32, %33 : vector<8x512xf32>
    %35 = vector.broadcast %cst_12 : f32 to vector<8x512xf32>
    %36 = arith.subf %32, %35 : vector<8x512xf32>
    %37 = arith.cmpf one, %36, %36 : vector<8x512xf32>
    %38 = vector.broadcast %cst_12 : f32 to vector<8x512xf32>
    %39 = arith.addf %32, %38 : vector<8x512xf32>
    %40 = math.absf %36 : vector<8x512xf32>
    %cst_13 = arith.constant 0.000000e+00 : f32
    %41 = vector.broadcast %cst_13 : f32 to vector<8x512xf32>
    %42 = arith.subf %41, %40 : vector<8x512xf32>
    %43 = math.exp %42 : vector<8x512xf32>
    %44 = math.log1p %43 : vector<8x512xf32>
    %45 = arith.addf %34, %44 : vector<8x512xf32>
    %46 = arith.select %37, %39, %45 : vector<8x512xi1>, vector<8x512xf32>
    %c32 = arith.constant 32 : index
    %c0_14 = arith.constant 0 : index
    %47 = vector.load %arg4[%c32, %c0_14] : memref<40x512xf32, #tpu.memory_space<vmem>>, vector<8x512xf32>
    tpu.vector_store %arg4[%c32, %c0_14], %46 {strides = array<i32>} : memref<40x512xf32, #tpu.memory_space<vmem>>, vector<8x512xf32>,
    return
  }
  func.func @transform_0(%arg0: i32) -> (i32, i32) {
    %c0_i32 = arith.constant 0 : i32
    %c0_i32_0 = arith.constant 0 : i32
    %c0_i32_1 = arith.constant 0 : i32
    return %c0_i32, %c0_i32_0 : i32, i32
  }
  func.func @transform_1(%arg0: i32) -> (i32, i32) {
    %c0_i32 = arith.constant 0 : i32
    %c0_i32_0 = arith.constant 0 : i32
    %c0_i32_1 = arith.constant 0 : i32
    return %c0_i32, %c0_i32_0 : i32, i32
  }
  func.func @transform_2(%arg0: i32) -> (i32, i32) {
    %c0_i32 = arith.constant 0 : i32
    %c0_i32_0 = arith.constant 0 : i32
    %c0_i32_1 = arith.constant 0 : i32
    return %c0_i32, %c0_i32_0 : i32, i32
  }
  func.func @transform_3(%arg0: i32) -> (i32, i32) {
    %c0_i32 = arith.constant 0 : i32
    %c0_i32_0 = arith.constant 0 : i32
    %c0_i32_1 = arith.constant 0 : i32
    return %c0_i32, %c0_i32_0 : i32, i32
  }
}

</mosaic_0001>

<llo_original>
// kernel: tpu_custom_call.1
$region0: #{tpu_custom_call.1}
  #allocation0 [shape = 'u32[]', space=smem, size = 0x4, offset = 0x4, fixed_abs, tag = 'smem constant byte address 0x4 - core index']
  #allocation1 [shape = 'u32[144,128]{1,0:T(1,128)}', space=vmem, size = 0x12000, scoped, tag = 'internal scratch']
  %s0 = inlined_call_operand.vmem [shape: f32[8,512], index: 0, kind: input, shape index: {}]
  %s1 = inlined_call_operand.vmem [shape: f32[40,8], index: 1, kind: input, shape index: {}]
  %s2 = inlined_call_operand.vmem [shape: f32[40,1], index: 2, kind: input, shape index: {}]
  %s3 = inlined_call_operand.hbm [shape: f32[40,512], index: 3, kind: output, shape index: {}]
  %s4 = sld [smem:[#allocation0]]
  $region22: #{tpu_custom_call.1} parent=0
    _
  %s6 = ssub.s32 1, %s4
  %s7 = scalar_select 0, %s6, %s4
  $region1: #{tpu_custom_call.1} parent=0
    #allocation2 [shape = 'u8[81920]{0}', space=vmem, size = 0x14000, scoped, tag = 'output window, operand 0, single buffered']
    #allocation3 [shape = 's32[1]{0}', space=sflag, size = 0x4, scoped, tag = 'scoped memory for tpu_custom_call.1']
    %8 = vsyncpa [#allocation3], 0
    // Predicated region
    $region2: #{tpu_custom_call.1} parent=1 // pred_check
      _
    $region3: #{tpu_custom_call.1} parent=1 // pred_check_branch
      %10 = sbr.rel (0) target = $region5
    $region4: #{tpu_custom_call.1} parent=1 // pred_region
      _
    $region5: #{tpu_custom_call.1} parent=1 // pred_fallthru
      _
    // Predicated region
    $region6: #{tpu_custom_call.1} parent=1 // pred_check
      _
    $region7: #{tpu_custom_call.1} parent=1 // pred_check_branch
      %12 = sbr.rel (0) target = $region9
    $region8: #{tpu_custom_call.1} parent=1 // pred_region
      _
    $region9: #{tpu_custom_call.1} parent=1 // pred_fallthru
      _
    // Predicated region
    $region10: #{tpu_custom_call.1} parent=1 // pred_check
      _
    $region11: #{tpu_custom_call.1} parent=1 // pred_check_branch
      %14 = sbr.rel (0) target = $region13
    $region12: #{tpu_custom_call.1} parent=1 // pred_region
      _
    $region13: #{tpu_custom_call.1} parent=1 // pred_fallthru
      _
    %v15 = vld [vmem:[%s1] sm:$0xff]
    %v16 = vld [vmem:[%s1 + $0x8] sm:$0xff]
    %v17 = vld [vmem:[%s1 + $0x10] sm:$0xff]
    %v18 = vld [vmem:[%s1 + $0x18] sm:$0xff]
    %v19 = vld [vmem:[%s1 + $0x20] sm:$0xff]
    %v20 = vld [vmem:[%s0] sm:$0xff]
    %v21 = vld [vmem:[%s0 + $0x8] sm:$0xff]
    %v22 = vld [vmem:[%s0 + $0x10] sm:$0xff]
    %v23 = vld [vmem:[%s0 + $0x18] sm:$0xff]
    %v24 = vld [vmem:[%s2] sm:$0xff]
    %v25 = vld [vmem:[%s2 + $0x8] sm:$0xff]
    %v26 = vld [vmem:[%s2 + $0x10] sm:$0xff]
    %v27 = vld [vmem:[%s2 + $0x18] sm:$0xff]
    %v28 = vld [vmem:[%s2 + $0x20] sm:$0xff]
    %30 = vset.pattern.permute.xlu0 0
    %31 = vperm.xlu0 %30, %v24
    %v32 = vpop.permute.xlu0 %31
    %35 = vset.pattern.permute.xlu0 0
    %36 = vperm.xlu0 %35, %v25
    %v37 = vpop.permute.xlu0 %36
    %40 = vset.pattern.permute.xlu0 0
    %41 = vperm.xlu0 %40, %v26
    %v42 = vpop.permute.xlu0 %41
    %45 = vset.pattern.permute.xlu0 0
    %46 = vperm.xlu0 %45, %v27
    %v47 = vpop.permute.xlu0 %46
    %50 = vset.pattern.permute.xlu0 0
    %51 = vperm.xlu0 %50, %v28
    %v52 = vpop.permute.xlu0 %51
    %vm54 = vcmask 64512
    %v56 = vsel %vm54, %v15, 0
    %v59 = vsel %vm54, %v16, 0
    %v62 = vsel %vm54, %v17, 0
    %v65 = vsel %vm54, %v18, 0
    %v68 = vsel %vm54, %v19, 0
    %70 = vmatprep.subr.mxu0 %v21
    %71 = vmatpush1.msra.mxu0 %v20
    %72 = vmatprep.subr.mxu0 0.0
    %73 = vmatpush1.msra.mxu0 0.0
    %74 = vmatprep.subr.mxu0 0.0
    %75 = vmatpush1.msra.mxu0 0.0
    %76 = vmatprep.subr.mxu0 0.0
    %77 = vmatpush1.msra.mxu0 0.0
    %78 = vmatprep.subr.mxu0 0.0
    %79 = vmatpush1.msra.mxu0 0.0
    %80 = vmatprep.subr.mxu0 0.0
    %81 = vmatpush1.msra.mxu0 0.0
    %82 = vmatprep.subr.mxu0 0.0
    %83 = vmatpush1.msra.mxu0 0.0
    %84 = vmatprep.subr.mxu0 0.0
    %85 = vmatpush1.msra.mxu0 0.0
    %86 = vmatprep.subr.mxu0 0.0
    %87 = vmatpush1.msra.mxu0 0.0
    %88 = vmatprep.subr.mxu0 0.0
    %89 = vmatpush1.msra.mxu0 0.0
    %90 = vmatprep.subr.mxu0 0.0
    %91 = vmatpush1.msra.mxu0 0.0
    %92 = vmatprep.subr.mxu0 0.0
    %93 = vmatpush1.msra.mxu0 0.0
    %94 = vmatprep.subr.mxu0 0.0
    %95 = vmatpush1.msra.mxu0 0.0
    %96 = vmatprep.subr.mxu0 0.0
    %97 = vmatpush1.msra.mxu0 0.0
    %98 = vmatprep.subr.mxu0 0.0
    %99 = vmatpush1.msra.mxu0 0.0
    %100 = vmatprep.subr.mxu0 0.0
    %101 = vmatpush1.msra.mxu0 0.0
    %102 = vmatprep.subr.mxu0 0.0
    %103 = vmatpush1.msra.mxu0 0.0
    %104 = vmatprep.subr.mxu0 0.0
    %105 = vmatpush1.msra.mxu0 0.0
    %106 = vmatprep.subr.mxu0 0.0
    %107 = vmatpush1.msra.mxu0 0.0
    %108 = vmatprep.subr.mxu0 0.0
    %109 = vmatpush1.msra.mxu0 0.0
    %110 = vmatprep.subr.mxu0 0.0
    %111 = vmatpush1.msra.mxu0 0.0
    %112 = vmatprep.subr.mxu0 0.0
    %113 = vmatpush1.msra.mxu0 0.0
    %114 = vmatprep.subr.mxu0 0.0
    %115 = vmatpush1.msra.mxu0 0.0
    %116 = vmatprep.subr.mxu0 0.0
    %117 = vmatpush1.msra.mxu0 0.0
    %118 = vmatprep.subr.mxu0 0.0
    %119 = vmatpush1.msra.mxu0 0.0
    %120 = vmatprep.subr.mxu0 0.0
    %121 = vmatpush1.msra.mxu0 0.0
    %122 = vmatprep.subr.mxu0 0.0
    %123 = vmatpush1.msra.mxu0 0.0
    %124 = vmatprep.subr.mxu0 0.0
    %125 = vmatpush1.msra.mxu0 0.0
    %126 = vmatprep.subr.mxu0 0.0
    %127 = vmatpush1.msra.mxu0 0.0
    %128 = vmatprep.subr.mxu0 0.0
    %129 = vmatpush1.msra.mxu0 0.0
    %130 = vmatprep.subr.mxu0 0.0
    %131 = vmatpush1.msra.mxu0 0.0
    %132 = vmatprep.subr.mxu0 0.0
    %133 = vmatpush1.msra.mxu0 0.0
    %134 = vmatprep.mubr.f32.mxu0 0.0
    %135 = vmatmul.mubr.f32.gmra.mrb[0].mxu0 %v56
    %v136 = vpop.f32.mrb[0].mxu0
    %v137 = vadd.f32 %v32, %v136
    %v138 = vpop.f32.mrb[0].mxu0
    %v139 = vadd.f32 %v32, %v138
    %140 = vmatprep.mubr.f32.mxu0 0.0
    %141 = vmatmul.mubr.f32.gmra.mrb[0].mxu0 %v59
    %v142 = vpop.f32.mrb[0].mxu0
    %v143 = vadd.f32 %v37, %v142
    %v144 = vpop.f32.mrb[0].mxu0
    %v145 = vadd.f32 %v37, %v144
    %146 = vmatprep.mubr.f32.mxu0 0.0
    %147 = vmatmul.mubr.f32.gmra.mrb[0].mxu0 %v62
    %v148 = vpop.f32.mrb[0].mxu0
    %v149 = vadd.f32 %v42, %v148
    %v150 = vpop.f32.mrb[0].mxu0
    %v151 = vadd.f32 %v42, %v150
    %152 = vmatprep.mubr.f32.mxu0 0.0
    %153 = vmatmul.mubr.f32.gmra.mrb[0].mxu0 %v65
    %v154 = vpop.f32.mrb[0].mxu0
    %v155 = vadd.f32 %v47, %v154
    %v156 = vpop.f32.mrb[0].mxu0
    %v157 = vadd.f32 %v47, %v156
    %158 = vmatprep.mubr.f32.mxu0 0.0
    %159 = vmatmul.mubr.f32.gmra.mrb[0].mxu0 %v68
    %v160 = vpop.f32.mrb[0].mxu0
    %v161 = vadd.f32 %v52, %v160
    %v162 = vpop.f32.mrb[0].mxu0
    %v163 = vadd.f32 %v52, %v162
    %164 = vdwg.mxu0
    %165 = vmatprep.subr.mxu0 %v23
    %166 = vmatpush1.msra.mxu0 %v22
    %167 = vmatprep.subr.mxu0 0.0
    %168 = vmatpush1.msra.mxu0 0.0
    %169 = vmatprep.subr.mxu0 0.0
    %170 = vmatpush1.msra.mxu0 0.0
    %171 = vmatprep.subr.mxu0 0.0
    %172 = vmatpush1.msra.mxu0 0.0
    %173 = vmatprep.subr.mxu0 0.0
    %174 = vmatpush1.msra.mxu0 0.0
    %175 = vmatprep.subr.mxu0 0.0
    %176 = vmatpush1.msra.mxu0 0.0
    %177 = vmatprep.subr.mxu0 0.0
    %178 = vmatpush1.msra.mxu0 0.0
    %179 = vmatprep.subr.mxu0 0.0
    %180 = vmatpush1.msra.mxu0 0.0
    %181 = vmatprep.subr.mxu0 0.0
    %182 = vmatpush1.msra.mxu0 0.0
    %183 = vmatprep.subr.mxu0 0.0
    %184 = vmatpush1.msra.mxu0 0.0
    %185 = vmatprep.subr.mxu0 0.0
    %186 = vmatpush1.msra.mxu0 0.0
    %187 = vmatprep.subr.mxu0 0.0
    %188 = vmatpush1.msra.mxu0 0.0
    %189 = vmatprep.subr.mxu0 0.0
    %190 = vmatpush1.msra.mxu0 0.0
    %191 = vmatprep.subr.mxu0 0.0
    %192 = vmatpush1.msra.mxu0 0.0
    %193 = vmatprep.subr.mxu0 0.0
    %194 = vmatpush1.msra.mxu0 0.0
    %195 = vmatprep.subr.mxu0 0.0
    %196 = vmatpush1.msra.mxu0 0.0
    %197 = vmatprep.subr.mxu0 0.0
    %198 = vmatpush1.msra.mxu0 0.0
    %199 = vmatprep.subr.mxu0 0.0
    %200 = vmatpush1.msra.mxu0 0.0
    %201 = vmatprep.subr.mxu0 0.0
    %202 = vmatpush1.msra.mxu0 0.0
    %203 = vmatprep.subr.mxu0 0.0
    %204 = vmatpush1.msra.mxu0 0.0
    %205 = vmatprep.subr.mxu0 0.0
    %206 = vmatpush1.msra.mxu0 0.0
    %207 = vmatprep.subr.mxu0 0.0
    %208 = vmatpush1.msra.mxu0 0.0
    %209 = vmatprep.subr.mxu0 0.0
    %210 = vmatpush1.msra.mxu0 0.0
    %211 = vmatprep.subr.mxu0 0.0
    %212 = vmatpush1.msra.mxu0 0.0
    %213 = vmatprep.subr.mxu0 0.0
    %214 = vmatpush1.msra.mxu0 0.0
    %215 = vmatprep.subr.mxu0 0.0
    %216 = vmatpush1.msra.mxu0 0.0
    %217 = vmatprep.subr.mxu0 0.0
    %218 = vmatpush1.msra.mxu0 0.0
    %219 = vmatprep.subr.mxu0 0.0
    %220 = vmatpush1.msra.mxu0 0.0
    %221 = vmatprep.subr.mxu0 0.0
    %222 = vmatpush1.msra.mxu0 0.0
    %223 = vmatprep.subr.mxu0 0.0
    %224 = vmatpush1.msra.mxu0 0.0
    %225 = vmatprep.subr.mxu0 0.0
    %226 = vmatpush1.msra.mxu0 0.0
    %227 = vmatprep.subr.mxu0 0.0
    %228 = vmatpush1.msra.mxu0 0.0
    %229 = vmatprep.mubr.f32.mxu0 0.0
    %230 = vmatmul.mubr.f32.gmra.mrb[0].mxu0 %v56
    %v231 = vpop.f32.mrb[0].mxu0
    %v232 = vadd.f32 %v32, %v231
    %v233 = vpop.f32.mrb[0].mxu0
    %v234 = vadd.f32 %v32, %v233
    %235 = vmatprep.mubr.f32.mxu0 0.0
    %236 = vmatmul.mubr.f32.gmra.mrb[0].mxu0 %v59
    %v237 = vpop.f32.mrb[0].mxu0
    %v238 = vadd.f32 %v37, %v237
    %v239 = vpop.f32.mrb[0].mxu0
    %v240 = vadd.f32 %v37, %v239
    %241 = vmatprep.mubr.f32.mxu0 0.0
    %242 = vmatmul.mubr.f32.gmra.mrb[0].mxu0 %v62
    %v243 = vpop.f32.mrb[0].mxu0
    %v244 = vadd.f32 %v42, %v243
    %v245 = vpop.f32.mrb[0].mxu0
    %v246 = vadd.f32 %v42, %v245
    %247 = vmatprep.mubr.f32.mxu0 0.0
    %248 = vmatmul.mubr.f32.gmra.mrb[0].mxu0 %v65
    %v249 = vpop.f32.mrb[0].mxu0
    %v250 = vadd.f32 %v47, %v249
    %v251 = vpop.f32.mrb[0].mxu0
    %v252 = vadd.f32 %v47, %v251
    %253 = vmatprep.mubr.f32.mxu0 0.0
    %254 = vmatmul.mubr.f32.gmra.mrb[0].mxu0 %v68
    %v255 = vpop.f32.mrb[0].mxu0
    %v256 = vadd.f32 %v52, %v255
    %v257 = vpop.f32.mrb[0].mxu0
    %v258 = vadd.f32 %v52, %v257
    %259 = vdwg.mxu0
    %v260 = vlaneseq
    %v261 = vand.u32 %v260, 127
    %v262 = vadd.s32 %v261, 128
    %v263 = vadd.s32 %v261, 256
    %v264 = vadd.s32 %v261, 384
    %v265 = vand.u32 %v261, 15
    %v266 = vand.u32 %v262, 15
    %v267 = vand.u32 %v263, 15
    %v268 = vand.u32 %v264, 15
    %v269 = vcvt.s32.f32 %v265
    %v270 = vcvt.s32.f32 %v266
    %v271 = vcvt.s32.f32 %v267
    %v272 = vcvt.s32.f32 %v268
    %v273 = vshra.s32 %v261, 4
    %v274 = vshra.s32 %v262, 4
    %v275 = vshra.s32 %v263, 4
    %v276 = vshra.s32 %v264, 4
    %v277 = vand.u32 %v273, 15
    %v278 = vand.u32 %v274, 15
    %v279 = vand.u32 %v275, 15
    %v280 = vand.u32 %v276, 15
    %v281 = vcvt.s32.f32 %v277
    %v282 = vcvt.s32.f32 %v278
    %v283 = vcvt.s32.f32 %v279
    %v284 = vcvt.s32.f32 %v280
    %v285 = vxor.u32 %v137, 2147483648
    %v286 = vxor.u32 %v139, 2147483648
    %v287 = vxor.u32 %v232, 2147483648
    %v288 = vxor.u32 %v234, 2147483648
    %v289 = vmul.f32 %v285, 1.442695
    %v290 = vpow.pop %v289
    %v291 = vmul.f32 %v286, 1.442695
    %v292 = vpow.pop %v291
    %v293 = vmul.f32 %v287, 1.442695
    %v294 = vpow.pop %v293
    %v295 = vmul.f32 %v288, 1.442695
    %v296 = vpow.pop %v295
    %v297 = vadd.f32 %v290, 1.0
    %v298 = vadd.f32 %v292, 1.0
    %v299 = vadd.f32 %v294, 1.0
    %v300 = vadd.f32 %v296, 1.0
    %v301 = vrcp.pop %v297
    %v302 = vmul.f32 1.0, %v301
    %v303 = vrcp.pop %v298
    %v304 = vmul.f32 1.0, %v303
    %v305 = vrcp.pop %v299
    %v306 = vmul.f32 1.0, %v305
    %v307 = vrcp.pop %v300
    %v308 = vmul.f32 1.0, %v307
    %309 = vst [vmem:[#allocation2] sm:$0xff] %v302
    %310 = vst [vmem:[#allocation2 + $0x8] sm:$0xff] %v304
    %311 = vst [vmem:[#allocation2 + $0x10] sm:$0xff] %v306
    %312 = vst [vmem:[#allocation2 + $0x18] sm:$0xff] %v308
    %v313 = vadd.f32 %v143, %v269
    %v314 = vadd.f32 %v145, %v270
    %v315 = vadd.f32 %v238, %v271
    %v316 = vadd.f32 %v240, %v272
    %317 = vst [vmem:[#allocation2 + $0x20] sm:$0xff] %v313
    %318 = vst [vmem:[#allocation2 + $0x28] sm:$0xff] %v314
    %319 = vst [vmem:[#allocation2 + $0x30] sm:$0xff] %v315
    %320 = vst [vmem:[#allocation2 + $0x38] sm:$0xff] %v316
    %v321 = vadd.f32 %v149, %v281
    %v322 = vadd.f32 %v151, %v282
    %v323 = vadd.f32 %v244, %v283
    %v324 = vadd.f32 %v246, %v284
    %325 = vst [vmem:[#allocation2 + $0x40] sm:$0xff] %v321
    %326 = vst [vmem:[#allocation2 + $0x48] sm:$0xff] %v322
    %327 = vst [vmem:[#allocation2 + $0x50] sm:$0xff] %v323
    %328 = vst [vmem:[#allocation2 + $0x58] sm:$0xff] %v324
    %329 = vst [vmem:[#allocation2 + $0x60] sm:$0xff] %v155
    %330 = vst [vmem:[#allocation2 + $0x68] sm:$0xff] %v157
    %331 = vst [vmem:[#allocation2 + $0x70] sm:$0xff] %v250
    %332 = vst [vmem:[#allocation2 + $0x78] sm:$0xff] %v252
    %v333 = vmax.f32 %v161, 0.0
    %v334 = vmax.f32 %v163, 0.0
    %v335 = vmax.f32 %v256, 0.0
    %v336 = vmax.f32 %v258, 0.0
    %vm337 = vcmp.ne.f32.partialorder %v161, %v161
    %vm338 = vcmp.ne.f32.partialorder %v163, %v163
    %vm339 = vcmp.ne.f32.partialorder %v256, %v256
    %vm340 = vcmp.ne.f32.partialorder %v258, %v258
    %v341 = vadd.f32 %v161, 0.0
    %v342 = vadd.f32 %v163, 0.0
    %v343 = vadd.f32 %v256, 0.0
    %v344 = vadd.f32 %v258, 0.0
    %v345 = vand.u32 2147483647, %v161
    %v346 = vand.u32 2147483647, %v163
    %v347 = vand.u32 2147483647, %v256
    %v348 = vand.u32 2147483647, %v258
    %v349 = vsub.f32 0.0, %v345
    %v350 = vsub.f32 0.0, %v346
    %v351 = vsub.f32 0.0, %v347
    %v352 = vsub.f32 0.0, %v348
    %v353 = vmul.f32 %v349, 1.442695
    %v354 = vpow.pop %v353
    %v355 = vmul.f32 %v350, 1.442695
    %v356 = vpow.pop %v355
    %v357 = vmul.f32 %v351, 1.442695
    %v358 = vpow.pop %v357
    %v359 = vmul.f32 %v352, 1.442695
    %v360 = vpow.pop %v359
    %v361 = vadd.f32 %v354, 1.0
    %v362 = vlog2.pop %v361
    %v363 = vmul.f32 %v362, 0.6931472
    %v364 = vmul.f32 -0.5, %v354
    %v365 = vadd.f32 %v364, 1.0
    %v366 = vmul.f32 %v365, %v354
    %v367 = vand.u32 2147483647, %v354
    %vm368 = vcmp.lt.f32.partialorder %v367, 0.0004427343
    %v369 = vsel %vm368, %v366, %v363
    %v370 = vadd.f32 %v356, 1.0
    %v371 = vlog2.pop %v370
    %v372 = vmul.f32 %v371, 0.6931472
    %v373 = vmul.f32 -0.5, %v356
    %v374 = vadd.f32 %v373, 1.0
    %v375 = vmul.f32 %v374, %v356
    %v376 = vand.u32 2147483647, %v356
    %vm377 = vcmp.lt.f32.partialorder %v376, 0.0004427343
    %v378 = vsel %vm377, %v375, %v372
    %v379 = vadd.f32 %v358, 1.0
    %v380 = vlog2.pop %v379
    %v381 = vmul.f32 %v380, 0.6931472
    %v382 = vmul.f32 -0.5, %v358
    %v383 = vadd.f32 %v382, 1.0
    %v384 = vmul.f32 %v383, %v358
    %v385 = vand.u32 2147483647, %v358
    %vm386 = vcmp.lt.f32.partialorder %v385, 0.0004427343
    %v387 = vsel %vm386, %v384, %v381
    %v388 = vadd.f32 %v360, 1.0
    %v389 = vlog2.pop %v388
    %v390 = vmul.f32 %v389, 0.6931472
    %v391 = vmul.f32 -0.5, %v360
    %v392 = vadd.f32 %v391, 1.0
    %v393 = vmul.f32 %v392, %v360
    %v394 = vand.u32 2147483647, %v360
    %vm395 = vcmp.lt.f32.partialorder %v394, 0.0004427343
    %v396 = vsel %vm395, %v393, %v390
    %v397 = vadd.f32 %v333, %v369
    %v398 = vadd.f32 %v334, %v378
    %v399 = vadd.f32 %v335, %v387
    %v400 = vadd.f32 %v336, %v396
    %v401 = vsel %vm337, %v341, %v397
    %v402 = vsel %vm338, %v342, %v398
    %v403 = vsel %vm339, %v343, %v399
    %v404 = vsel %vm340, %v344, %v400
    %405 = vst [vmem:[#allocation2 + $0x80] sm:$0xff] %v401
    %406 = vst [vmem:[#allocation2 + $0x88] sm:$0xff] %v402
    %407 = vst [vmem:[#allocation2 + $0x90] sm:$0xff] %v403
    %408 = vst [vmem:[#allocation2 + $0x98] sm:$0xff] %v404
    // Predicated region
    $region14: #{tpu_custom_call.1} parent=1 // pred_check
      _
    $region15: #{tpu_custom_call.1} parent=1 // pred_check_branch
      %410 = sbr.rel (0) target = $region17
    $region16: #{tpu_custom_call.1} parent=1 // pred_region
      %s412 = ssub.s32 2560, 2560
      %413 = vsyncadd [#allocation3], %s412
      %s414 = sshll.u32 [#allocation2], 4
      %s415 = int_to_ptr.vmem [resolvable:$true] %s414
      %420 = dma.vmem_to_hbm [thread:$0]  %s415, 2560, %s3, [#allocation3], 512, 512, 32
    $region17: #{tpu_custom_call.1} parent=1 // pred_fallthru
      _
    // Predicated region
    $region18: #{tpu_custom_call.1} parent=1 // pred_check
      _
    $region19: #{tpu_custom_call.1} parent=1 // pred_check_branch
      %422 = sbr.rel (0) target = $region21
    $region20: #{tpu_custom_call.1} parent=1 // pred_region
      %423 = dma.done [#allocation3], 2560
    $region21: #{tpu_custom_call.1} parent=1 // pred_fallthru
      _
    %424 = vsyncpa [#allocation3], 1

</llo_original>
